<compile_context>
chip_gen: v7x
topology: tpu7x:2x2x1
jax: 0.10.0
libtpu: 0.0.40
codegen_flags: <defaults>
</compile_context>

<pallas_src>
import functools
import math

import jax
import jax.numpy as jnp
from jax.experimental import pallas as pl
from jax.experimental.pallas import tpu as pltpu


# ----------------------------------------------------------------------------
# Kernel: one grid step == one tile of rows; all layers of the group fused.
# refs layout: (x_ref, w1_ref, b1_ref, ..., wL_ref, bL_ref, out_ref)
# ----------------------------------------------------------------------------
def _mlp_group_kernel(x_ref, *refs, num_layers, relu_last):
    out_ref = refs[-1]
    h = x_ref[...].astype(jnp.bfloat16)                       # (TM, D_in) bf16 MXU operand
    for i in range(num_layers):
        w_ref = refs[2 * i]                                    # (D_in_i, D_out_i) bf16, resident
        b_ref = refs[2 * i + 1]                                # (1, D_out_i)      f32, resident
        y = jnp.dot(h, w_ref[...], preferred_element_type=jnp.float32) + b_ref[...]
        if relu_last or i < num_layers - 1:
            y = jnp.maximum(y, 0.0)
        if i < num_layers - 1:
            h = y.astype(jnp.bfloat16)                         # keep inter-layer act in bf16
        else:
            out_ref[...] = y.astype(out_ref.dtype)


# ----------------------------------------------------------------------------
# One-time parameter preparation (hoisted out of the forward path)
# ----------------------------------------------------------------------------
def prepare_params(weights, biases):
    """weights[i]: (out_i, in_i) f32 (PyTorch layout), biases[i]: (out_i,) f32.
    Returns kernel-ready operands: w (in_i, out_i) bf16, b (1, out_i) f32."""
    w_ops = [jnp.asarray(w).T.astype(jnp.bfloat16) for w in weights]
    b_ops = [jnp.asarray(b).reshape(1, -1).astype(jnp.float32) for b in biases]
    return w_ops, b_ops


# ----------------------------------------------------------------------------
# Tiling / grouping helpers
# ----------------------------------------------------------------------------
_PARAM_VMEM_BUDGET = 24 << 20   # resident bf16 weights + f32 biases per fused call (v7x-safe)


def _round_up(x, m):
    return ((x + m - 1) // m) * m


def _choose_tm(n_rows, widest_dim):
    """Rows per grid step: multiple of 8, up to 512, >=2 grid steps when possible."""
    if n_rows <= 8:
        return 8
    tm = min(512, _round_up(n_rows, 8))
    if pl.cdiv(n_rows, tm) < 2:                      # >=2 steps -> v7x megacore can shard
        tm = max(8, _round_up(pl.cdiv(n_rows, 2), 8))
    # keep the per-step activation working set bounded (x/out tiles + f32 intermediates)
    while tm >= 16 and 6 * tm * widest_dim * 4 > (16 << 20):
        tm = max(8, _round_up(tm // 2, 8))
    return tm


def _split_groups(w_ops, b_ops):
    """Greedily group consecutive layers so resident params fit the VMEM budget."""
    groups, cur, cur_bytes = [], [], 0
    for w, b in zip(w_ops, b_ops):
        nbytes = w.size * w.dtype.itemsize + b.size * b.dtype.itemsize
        if cur and cur_bytes + nbytes > _PARAM_VMEM_BUDGET:
            groups.append(cur)
            cur, cur_bytes = [], 0
        cur.append((w, b))
        cur_bytes += nbytes
    if cur:
        groups.append(cur)
    # TODO(synk): a single layer whose weights alone exceed the budget would need a
    # blocked contraction dim + f32 accumulator scratch; not implemented here.
    return groups


# ----------------------------------------------------------------------------
# One fused pallas_call over a group of consecutive layers
# ----------------------------------------------------------------------------
def _call_group(x2, layer_params, *, relu_last, out_dtype, tm):
    n_rows, d_in = x2.shape
    d_out = layer_params[-1][0].shape[1]
    num_layers = len(layer_params)
    widest = max(max(w.shape) for w, _ in layer_params)

    # VMEM footprint estimate: double-buffered x/out row tiles + single-buffered resident
    # params + live intermediates, 25% headroom; raise above the scoped default only when
    # needed and cap at v7x's 64 MiB physical VMEM.
    param_bytes = sum(w.size * w.dtype.itemsize + b.size * b.dtype.itemsize
                      for w, b in layer_params)
    act_bytes = 2 * tm * (d_in * x2.dtype.itemsize + d_out * jnp.dtype(out_dtype).itemsize)
    inter_bytes = 2 * tm * widest * 4
    est = int(1.25 * (param_bytes + act_bytes + inter_bytes)) + (2 << 20)
    vmem_limit = min(64 << 20, max(32 << 20, est))

    def run(single_buffer):
        resident_kwargs = {"pipeline_mode": pl.Buffered(1)} if single_buffer else {}
        operands = [x2]
        in_specs = [pl.BlockSpec((tm, d_in), lambda i: (i, 0))]
        for w, b in layer_params:
            operands.append(w)
            in_specs.append(pl.BlockSpec(w.shape, lambda i: (0, 0), **resident_kwargs))
            operands.append(b)
            in_specs.append(pl.BlockSpec(b.shape, lambda i: (0, 0), **resident_kwargs))
        return pl.pallas_call(
            functools.partial(_mlp_group_kernel,
                              num_layers=num_layers, relu_last=relu_last),
            out_shape=jax.ShapeDtypeStruct((n_rows, d_out), out_dtype),
            grid=(pl.cdiv(n_rows, tm),),
            in_specs=in_specs,
            out_specs=pl.BlockSpec((tm, d_out), lambda i: (i, 0)),
            compiler_params=pltpu.CompilerParams(
                dimension_semantics=("parallel",),
                vmem_limit_bytes=vmem_limit),
        )(*operands)

    try:
        return run(single_buffer=True)
    except Exception:
        # Some jax builds reject single-buffered pipeline_mode; keep running correctly.
        return run(single_buffer=False)


# ----------------------------------------------------------------------------
# Forward wrapper
# ----------------------------------------------------------------------------
def mlp_forward(x, w_ops, b_ops):
    """x: (..., input_dim). w_ops/b_ops come from prepare_params (kernel layout)."""
    assert len(w_ops) == len(b_ops)
    lead_shape = x.shape[:-1]
    out_dim = w_ops[-1].shape[1]
    n_rows = int(math.prod(lead_shape)) if lead_shape else 1
    if n_rows == 0:
        return jnp.zeros((*lead_shape, out_dim), x.dtype)

    x2 = x.reshape(n_rows, x.shape[-1])            # collapse leading dims (layout-preserving)
    widest = max(max(w.shape) for w in w_ops)
    tm = _choose_tm(n_rows, widest)

    groups = _split_groups(w_ops, b_ops)
    h = x2
    for gi, group in enumerate(groups):
        is_last = gi == len(groups) - 1
        h = _call_group(h, group,
                        relu_last=not is_last,
                        out_dtype=x.dtype if is_last else jnp.bfloat16,
                        tm=tm)
    return h.reshape(*lead_shape, out_dim)


# ----------------------------------------------------------------------------
# Pure-JAX reference (mirrors the PyTorch MLP.forward semantics, f32 throughout)
# ----------------------------------------------------------------------------
def reference_mlp(x, weights, biases):
    num_layers = len(weights)
    h = x
    for i, (w, b) in enumerate(zip(weights, biases)):
        h = h @ w.T + b
        if i < num_layers - 1:
            h = jnp.maximum(h, 0.0)
    return h


# ----------------------------------------------------------------------------
# Deterministic parameter init (shapes per the module __init__)
# ----------------------------------------------------------------------------
def init_params(key, input_dim, hidden_dim, output_dim, num_layers):
    hs = [hidden_dim] * (num_layers - 1)
    in_dims = [input_dim] + hs
    out_dims = hs + [output_dim]
    weights, biases = [], []
    s = 0.05
    for n_in, n_out in zip(in_dims, out_dims):
        key, kw, kb = jax.random.split(key, 3)
        weights.append(s * jax.random.normal(kw, (n_out, n_in), jnp.float32))
        biases.append(s * jax.random.normal(kb, (n_out,), jnp.float32))
    return weights, biases


if __name__ == "__main__":
    # Small shapes consistent with the module: x of shape (batch, seq, input_dim).
    B, S = 2, 16
    INPUT_DIM, HIDDEN_DIM, OUTPUT_DIM, NUM_LAYERS = 32, 64, 32, 3

    key = jax.random.PRNGKey(0)
    k_x, k_p = jax.random.split(key)
    x = jax.random.normal(k_x, (B, S, INPUT_DIM), jnp.float32)
    weights, biases = init_params(k_p, INPUT_DIM, HIDDEN_DIM, OUTPUT_DIM, NUM_LAYERS)

    # One-time parameter prep (hoisted out of the forward path).
    w_ops, b_ops = prepare_params(weights, biases)
    w_ops = [jax.block_until_ready(w) for w in w_ops]
    b_ops = [jax.block_until_ready(b) for b in b_ops]

    out = jax.block_until_ready(mlp_forward(x, w_ops, b_ops))

    ref = jax.block_until_ready(reference_mlp(x, weights, biases))
    assert out.shape == (B, S, OUTPUT_DIM)
    # bf16 MXU operands with f32 accumulation -> slightly looser tolerance than pure f32.
    assert jnp.allclose(out, ref, atol=2e-2, rtol=2e-2), "mismatch vs JAX reference"

    print("KERNEL_OK")
</pallas_src>

<mosaic_0001>
module attributes {stable_mosaic.version = 11 : i64} {
  func.func @_mlp_group_kernel(%arg0: i32, %arg1: memref<16x32xf32, #tpu.memory_space<vmem>>, %arg2: memref<32x64xbf16, #tpu.memory_space<vmem>>, %arg3: memref<1x64xf32, #tpu.memory_space<vmem>>, %arg4: memref<64x64xbf16, #tpu.memory_space<vmem>>, %arg5: memref<1x64xf32, #tpu.memory_space<vmem>>, %arg6: memref<64x32xbf16, #tpu.memory_space<vmem>>, %arg7: memref<1x32xf32, #tpu.memory_space<vmem>>, %arg8: memref<16x32xf32, #tpu.memory_space<vmem>>) attributes {dimension_semantics = [#tpu.dimension_semantics<parallel>], iteration_bounds = array<i64: 2>, scalar_prefetch = 0 : i64, scratch_operands = 0 : i64, tpu.core_type = #tpu.core_type<tc>, window_params = [{transform_indices = @transform_0, window_bounds = array<i64: 16, 32>}, {pipeline_mode = #tpu.pipeline_mode<synchronous>, transform_indices = @transform_1, window_bounds = array<i64: 32, 64>}, {pipeline_mode = #tpu.pipeline_mode<synchronous>, transform_indices = @transform_2, window_bounds = array<i64: 1, 64>}, {pipeline_mode = #tpu.pipeline_mode<synchronous>, transform_indices = @transform_3, window_bounds = array<i64: 64, 64>}, {pipeline_mode = #tpu.pipeline_mode<synchronous>, transform_indices = @transform_4, window_bounds = array<i64: 1, 64>}, {pipeline_mode = #tpu.pipeline_mode<synchronous>, transform_indices = @transform_5, window_bounds = array<i64: 64, 32>}, {pipeline_mode = #tpu.pipeline_mode<synchronous>, transform_indices = @transform_6, window_bounds = array<i64: 1, 32>}, {transform_indices = @transform_7, window_bounds = array<i64: 16, 32>}]} {
    %c0 = arith.constant 0 : index
    %c0_0 = arith.constant 0 : index
    %0 = vector.load %arg1[%c0, %c0_0] : memref<16x32xf32, #tpu.memory_space<vmem>>, vector<16x32xf32>
    %1 = arith.truncf %0 : vector<16x32xf32> to vector<16x32xbf16>
    %c0_1 = arith.constant 0 : index
    %c0_2 = arith.constant 0 : index
    %2 = vector.load %arg2[%c0_1, %c0_2] : memref<32x64xbf16, #tpu.memory_space<vmem>>, vector<32x64xbf16>
    %cst = arith.constant dense<0.000000e+00> : vector<16x64xf32>
    %3 = tpu.matmul %1, %2, %cst {dimension_numbers = #tpu.dot_dimension_numbers<[1], [0], [0], [1], [0, 0, 1, 1], [], []>} : vector<16x32xbf16>, vector<32x64xbf16>, vector<16x64xf32> -> vector<16x64xf32>
    %c0_3 = arith.constant 0 : index
    %c0_4 = arith.constant 0 : index
    %4 = vector.load %arg3[%c0_3, %c0_4] : memref<1x64xf32, #tpu.memory_space<vmem>>, vector<1x64xf32>
    %5 = vector.broadcast %4 : vector<1x64xf32> to vector<16x64xf32>
    %6 = arith.addf %3, %5 : vector<16x64xf32>
    %cst_5 = arith.constant 0.000000e+00 : f32
    %7 = vector.broadcast %cst_5 : f32 to vector<16x64xf32>
    %8 = arith.maximumf %6, %7 : vector<16x64xf32>
    %9 = arith.truncf %8 : vector<16x64xf32> to vector<16x64xbf16>
    %c0_6 = arith.constant 0 : index
    %c0_7 = arith.constant 0 : index
    %10 = vector.load %arg4[%c0_6, %c0_7] : memref<64x64xbf16, #tpu.memory_space<vmem>>, vector<64x64xbf16>
    %cst_8 = arith.constant dense<0.000000e+00> : vector<16x64xf32>
    %11 = tpu.matmul %9, %10, %cst_8 {dimension_numbers = #tpu.dot_dimension_numbers<[1], [0], [0], [1], [0, 0, 1, 1], [], []>} : vector<16x64xbf16>, vector<64x64xbf16>, vector<16x64xf32> -> vector<16x64xf32>
    %c0_9 = arith.constant 0 : index
    %c0_10 = arith.constant 0 : index
    %12 = vector.load %arg5[%c0_9, %c0_10] : memref<1x64xf32, #tpu.memory_space<vmem>>, vector<1x64xf32>
    %13 = vector.broadcast %12 : vector<1x64xf32> to vector<16x64xf32>
    %14 = arith.addf %11, %13 : vector<16x64xf32>
    %cst_11 = arith.constant 0.000000e+00 : f32
    %15 = vector.broadcast %cst_11 : f32 to vector<16x64xf32>
    %16 = arith.maximumf %14, %15 : vector<16x64xf32>
    %17 = arith.truncf %16 : vector<16x64xf32> to vector<16x64xbf16>
    %c0_12 = arith.constant 0 : index
    %c0_13 = arith.constant 0 : index
    %18 = vector.load %arg6[%c0_12, %c0_13] : memref<64x32xbf16, #tpu.memory_space<vmem>>, vector<64x32xbf16>
    %cst_14 = arith.constant dense<0.000000e+00> : vector<16x32xf32>
    %19 = tpu.matmul %17, %18, %cst_14 {dimension_numbers = #tpu.dot_dimension_numbers<[1], [0], [0], [1], [0, 0, 1, 1], [], []>} : vector<16x64xbf16>, vector<64x32xbf16>, vector<16x32xf32> -> vector<16x32xf32>
    %c0_15 = arith.constant 0 : index
    %c0_16 = arith.constant 0 : index
    %20 = vector.load %arg7[%c0_15, %c0_16] : memref<1x32xf32, #tpu.memory_space<vmem>>, vector<1x32xf32>
    %21 = vector.broadcast %20 : vector<1x32xf32> to vector<16x32xf32>
    %22 = arith.addf %19, %21 : vector<16x32xf32>
    %c0_17 = arith.constant 0 : index
    %c0_18 = arith.constant 0 : index
    %23 = vector.load %arg8[%c0_17, %c0_18] : memref<16x32xf32, #tpu.memory_space<vmem>>, vector<16x32xf32>
    tpu.vector_store %arg8[%c0_17, %c0_18], %22 {strides = array<i32>} : memref<16x32xf32, #tpu.memory_space<vmem>>, vector<16x32xf32>,
    return
  }
  func.func @transform_0(%arg0: i32) -> (i32, i32) {
    %c0_i32 = arith.constant 0 : i32
    %c0_i32_0 = arith.constant 0 : i32
    return %arg0, %c0_i32 : i32, i32
  }
  func.func @transform_1(%arg0: i32) -> (i32, i32) {
    %c0_i32 = arith.constant 0 : i32
    %c0_i32_0 = arith.constant 0 : i32
    %c0_i32_1 = arith.constant 0 : i32
    return %c0_i32, %c0_i32_0 : i32, i32
  }
  func.func @transform_2(%arg0: i32) -> (i32, i32) {
    %c0_i32 = arith.constant 0 : i32
    %c0_i32_0 = arith.constant 0 : i32
    %c0_i32_1 = arith.constant 0 : i32
    return %c0_i32, %c0_i32_0 : i32, i32
  }
  func.func @transform_3(%arg0: i32) -> (i32, i32) {
    %c0_i32 = arith.constant 0 : i32
    %c0_i32_0 = arith.constant 0 : i32
    %c0_i32_1 = arith.constant 0 : i32
    return %c0_i32, %c0_i32_0 : i32, i32
  }
  func.func @transform_4(%arg0: i32) -> (i32, i32) {
    %c0_i32 = arith.constant 0 : i32
    %c0_i32_0 = arith.constant 0 : i32
    %c0_i32_1 = arith.constant 0 : i32
    return %c0_i32, %c0_i32_0 : i32, i32
  }
  func.func @transform_5(%arg0: i32) -> (i32, i32) {
    %c0_i32 = arith.constant 0 : i32
    %c0_i32_0 = arith.constant 0 : i32
    %c0_i32_1 = arith.constant 0 : i32
    return %c0_i32, %c0_i32_0 : i32, i32
  }
  func.func @transform_6(%arg0: i32) -> (i32, i32) {
    %c0_i32 = arith.constant 0 : i32
    %c0_i32_0 = arith.constant 0 : i32
    %c0_i32_1 = arith.constant 0 : i32
    return %c0_i32, %c0_i32_0 : i32, i32
  }
  func.func @transform_7(%arg0: i32) -> (i32, i32) {
    %c0_i32 = arith.constant 0 : i32
    %c0_i32_0 = arith.constant 0 : i32
    return %arg0, %c0_i32 : i32, i32
  }
}

module attributes {stable_mosaic.version = 11 : i64} {
  func.func @_mlp_group_kernel(%arg0: i32, %arg1: memref<16x32xf32, #tpu.memory_space<vmem>>, %arg2: memref<32x64xbf16, #tpu.memory_space<vmem>>, %arg3: memref<1x64xf32, #tpu.memory_space<vmem>>, %arg4: memref<64x64xbf16, #tpu.memory_space<vmem>>, %arg5: memref<1x64xf32, #tpu.memory_space<vmem>>, %arg6: memref<64x32xbf16, #tpu.memory_space<vmem>>, %arg7: memref<1x32xf32, #tpu.memory_space<vmem>>, %arg8: memref<16x32xf32, #tpu.memory_space<vmem>>) attributes {dimension_semantics = [#tpu.dimension_semantics<parallel>], iteration_bounds = array<i64: 2>, scalar_prefetch = 0 : i64, scratch_operands = 0 : i64, tpu.core_type = #tpu.core_type<tc>, window_params = [{transform_indices = @transform_0, window_bounds = array<i64: 16, 32>}, {pipeline_mode = #tpu.pipeline_mode<synchronous>, transform_indices = @transform_1, window_bounds = array<i64: 32, 64>}, {pipeline_mode = #tpu.pipeline_mode<synchronous>, transform_indices = @transform_2, window_bounds = array<i64: 1, 64>}, {pipeline_mode = #tpu.pipeline_mode<synchronous>, transform_indices = @transform_3, window_bounds = array<i64: 64, 64>}, {pipeline_mode = #tpu.pipeline_mode<synchronous>, transform_indices = @transform_4, window_bounds = array<i64: 1, 64>}, {pipeline_mode = #tpu.pipeline_mode<synchronous>, transform_indices = @transform_5, window_bounds = array<i64: 64, 32>}, {pipeline_mode = #tpu.pipeline_mode<synchronous>, transform_indices = @transform_6, window_bounds = array<i64: 1, 32>}, {transform_indices = @transform_7, window_bounds = array<i64: 16, 32>}]} {
    %c0 = arith.constant 0 : index
    %c0_0 = arith.constant 0 : index
    %0 = vector.load %arg1[%c0, %c0_0] : memref<16x32xf32, #tpu.memory_space<vmem>>, vector<16x32xf32>
    %1 = arith.truncf %0 : vector<16x32xf32> to vector<16x32xbf16>
    %c0_1 = arith.constant 0 : index
    %c0_2 = arith.constant 0 : index
    %2 = vector.load %arg2[%c0_1, %c0_2] : memref<32x64xbf16, #tpu.memory_space<vmem>>, vector<32x64xbf16>
    %cst = arith.constant dense<0.000000e+00> : vector<16x64xf32>
    %3 = tpu.matmul %1, %2, %cst {dimension_numbers = #tpu.dot_dimension_numbers<[1], [0], [0], [1], [0, 0, 1, 1], [], []>} : vector<16x32xbf16>, vector<32x64xbf16>, vector<16x64xf32> -> vector<16x64xf32>
    %c0_3 = arith.constant 0 : index
    %c0_4 = arith.constant 0 : index
    %4 = vector.load %arg3[%c0_3, %c0_4] : memref<1x64xf32, #tpu.memory_space<vmem>>, vector<1x64xf32>
    %5 = vector.broadcast %4 : vector<1x64xf32> to vector<16x64xf32>
    %6 = arith.addf %3, %5 : vector<16x64xf32>
    %cst_5 = arith.constant 0.000000e+00 : f32
    %7 = vector.broadcast %cst_5 : f32 to vector<16x64xf32>
    %8 = arith.maximumf %6, %7 : vector<16x64xf32>
    %9 = arith.truncf %8 : vector<16x64xf32> to vector<16x64xbf16>
    %c0_6 = arith.constant 0 : index
    %c0_7 = arith.constant 0 : index
    %10 = vector.load %arg4[%c0_6, %c0_7] : memref<64x64xbf16, #tpu.memory_space<vmem>>, vector<64x64xbf16>
    %cst_8 = arith.constant dense<0.000000e+00> : vector<16x64xf32>
    %11 = tpu.matmul %9, %10, %cst_8 {dimension_numbers = #tpu.dot_dimension_numbers<[1], [0], [0], [1], [0, 0, 1, 1], [], []>} : vector<16x64xbf16>, vector<64x64xbf16>, vector<16x64xf32> -> vector<16x64xf32>
    %c0_9 = arith.constant 0 : index
    %c0_10 = arith.constant 0 : index
    %12 = vector.load %arg5[%c0_9, %c0_10] : memref<1x64xf32, #tpu.memory_space<vmem>>, vector<1x64xf32>
    %13 = vector.broadcast %12 : vector<1x64xf32> to vector<16x64xf32>
    %14 = arith.addf %11, %13 : vector<16x64xf32>
    %cst_11 = arith.constant 0.000000e+00 : f32
    %15 = vector.broadcast %cst_11 : f32 to vector<16x64xf32>
    %16 = arith.maximumf %14, %15 : vector<16x64xf32>
    %17 = arith.truncf %16 : vector<16x64xf32> to vector<16x64xbf16>
    %c0_12 = arith.constant 0 : index
    %c0_13 = arith.constant 0 : index
    %18 = vector.load %arg6[%c0_12, %c0_13] : memref<64x32xbf16, #tpu.memory_space<vmem>>, vector<64x32xbf16>
    %cst_14 = arith.constant dense<0.000000e+00> : vector<16x32xf32>
    %19 = tpu.matmul %17, %18, %cst_14 {dimension_numbers = #tpu.dot_dimension_numbers<[1], [0], [0], [1], [0, 0, 1, 1], [], []>} : vector<16x64xbf16>, vector<64x32xbf16>, vector<16x32xf32> -> vector<16x32xf32>
    %c0_15 = arith.constant 0 : index
    %c0_16 = arith.constant 0 : index
    %20 = vector.load %arg7[%c0_15, %c0_16] : memref<1x32xf32, #tpu.memory_space<vmem>>, vector<1x32xf32>
    %21 = vector.broadcast %20 : vector<1x32xf32> to vector<16x32xf32>
    %22 = arith.addf %19, %21 : vector<16x32xf32>
    %c0_17 = arith.constant 0 : index
    %c0_18 = arith.constant 0 : index
    %23 = vector.load %arg8[%c0_17, %c0_18] : memref<16x32xf32, #tpu.memory_space<vmem>>, vector<16x32xf32>
    tpu.vector_store %arg8[%c0_17, %c0_18], %22 {strides = array<i32>} : memref<16x32xf32, #tpu.memory_space<vmem>>, vector<16x32xf32>,
    return
  }
  func.func @transform_0(%arg0: i32) -> (i32, i32) {
    %c0_i32 = arith.constant 0 : i32
    %c0_i32_0 = arith.constant 0 : i32
    return %arg0, %c0_i32 : i32, i32
  }
  func.func @transform_1(%arg0: i32) -> (i32, i32) {
    %c0_i32 = arith.constant 0 : i32
    %c0_i32_0 = arith.constant 0 : i32
    %c0_i32_1 = arith.constant 0 : i32
    return %c0_i32, %c0_i32_0 : i32, i32
  }
  func.func @transform_2(%arg0: i32) -> (i32, i32) {
    %c0_i32 = arith.constant 0 : i32
    %c0_i32_0 = arith.constant 0 : i32
    %c0_i32_1 = arith.constant 0 : i32
    return %c0_i32, %c0_i32_0 : i32, i32
  }
  func.func @transform_3(%arg0: i32) -> (i32, i32) {
    %c0_i32 = arith.constant 0 : i32
    %c0_i32_0 = arith.constant 0 : i32
    %c0_i32_1 = arith.constant 0 : i32
    return %c0_i32, %c0_i32_0 : i32, i32
  }
  func.func @transform_4(%arg0: i32) -> (i32, i32) {
    %c0_i32 = arith.constant 0 : i32
    %c0_i32_0 = arith.constant 0 : i32
    %c0_i32_1 = arith.constant 0 : i32
    return %c0_i32, %c0_i32_0 : i32, i32
  }
  func.func @transform_5(%arg0: i32) -> (i32, i32) {
    %c0_i32 = arith.constant 0 : i32
    %c0_i32_0 = arith.constant 0 : i32
    %c0_i32_1 = arith.constant 0 : i32
    return %c0_i32, %c0_i32_0 : i32, i32
  }
  func.func @transform_6(%arg0: i32) -> (i32, i32) {
    %c0_i32 = arith.constant 0 : i32
    %c0_i32_0 = arith.constant 0 : i32
    %c0_i32_1 = arith.constant 0 : i32
    return %c0_i32, %c0_i32_0 : i32, i32
  }
  func.func @transform_7(%arg0: i32) -> (i32, i32) {
    %c0_i32 = arith.constant 0 : i32
    %c0_i32_0 = arith.constant 0 : i32
    return %arg0, %c0_i32 : i32, i32
  }
}

</mosaic_0001>

<llo_original>
// kernel: tpu_custom_call.1
$region0: #{tpu_custom_call.1}
  #allocation0 [shape = 'u32[]', space=smem, size = 0x4, offset = 0x4, fixed_abs, tag = 'smem constant byte address 0x4 - core index']
  #allocation1 [shape = 'u32[144,128]{1,0:T(1,128)}', space=vmem, size = 0x12000, scoped, tag = 'internal scratch']
  %s0 = inlined_call_operand.vmem [shape: f32[32,32], index: 0, kind: input, shape index: {}]
  %s1 = inlined_call_operand.vmem [shape: bf16[32,64], index: 1, kind: input, shape index: {}]
  %s2 = inlined_call_operand.vmem [shape: f32[1,64], index: 2, kind: input, shape index: {}]
  %s3 = inlined_call_operand.hbm [shape: bf16[64,64], index: 3, kind: input, shape index: {}]
  %s4 = inlined_call_operand.vmem [shape: f32[1,64], index: 4, kind: input, shape index: {}]
  %s5 = inlined_call_operand.vmem [shape: bf16[64,32], index: 5, kind: input, shape index: {}]
  %s6 = inlined_call_operand.vmem [shape: f32[1,32], index: 6, kind: input, shape index: {}]
  %s7 = inlined_call_operand.hbm [shape: f32[32,32], index: 7, kind: output, shape index: {}]
  %s8 = sld [smem:[#allocation0]]
  $region65: #{tpu_custom_call.1} parent=0
    _
  %s10 = ssub.s32 1, %s8
  %s11 = scalar_select 0, %s10, %s8
  $region1: #{tpu_custom_call.1} parent=0
    #allocation2 [shape = 'u8[16384]{0}', space=vmem, size = 0x4000, scoped, tag = 'input window, operand 3, single buffered']
    #allocation3 [shape = 's32[2]{0}', space=sflag, size = 0x8, scoped, tag = 'scoped memory for tpu_custom_call.1']
    #allocation4 [shape = 's32[2]{0}', space=sflag, size = 0x8, scoped, tag = 'scoped memory for tpu_custom_call.1']
    #allocation5 [shape = 'u8[16384]{0}', space=vmem, size = 0x4000, scoped, tag = 'output window, operand 0']
    %12 = vsyncpa [#allocation3], 0
    %13 = vsyncpa [#allocation4], 0
    %s14 = scalar_lea.sflag [#allocation4], 1
    %15 = vsyncpa %s14, 0
    loop: start=0, step=1, limit=4
    $region2: #{tpu_custom_call.1} parent=1 // loop_pre_header
      _
    $region3: #{tpu_custom_call.1} parent=1 // loop_header
      %s17 = sphi 0, %s21
      %p18 = scmp.ge.s32.totalorder %s17, 4
      %s27 = sphi 0, %s29
      %s30 = sphi 0, %s27
      %s31 = sphi 0, %s30
      %s47 = sphi 0, %s31
      %s51 = sphi 0, %s51
      %s53 = sphi 0, %s51
      %s54 = sphi 0, %s53
      %s68 = sphi 0, %s54
      %s72 = sphi 0, %s72
      %s74 = sphi 0, %s72
      %s75 = sphi 0, %s74
      %s89 = sphi 0, %s75
      %s93 = sphi 0, %s93
      %s95 = sphi 0, %s93
      %s96 = sphi 0, %s95
      %s110 = sphi 0, %s96
      %s114 = sphi 0, %s114
      %s116 = sphi 0, %s114
      %s117 = sphi 0, %s116
      %s131 = sphi 0, %s117
      %s135 = sphi 0, %s135
      %s137 = sphi 0, %s135
      %s138 = sphi 0, %s137
      %s152 = sphi 0, %s138
      %s156 = sphi 0, %s156
      %s158 = sphi 0, %s156
      %s159 = sphi 0, %s158
      %s173 = sphi 0, %s159
      %s179 = sphi 0, %s181
      %s182 = sphi 0, %s179
      %s183 = sphi 0, %s182
      %s199 = sphi 0, %s183
    $region4: #{tpu_custom_call.1} parent=1 // loop_header_branch
      %20 = sbr.rel (%p18) target = $region8
    $region5: #{tpu_custom_call.1} parent=1 // loop_body
      %s22 = ssub.s32 %s17, 1
      %s23 = ssub.s32 %s17, 2
      %s24 = sadd.s32 %s17, 1
      %s25 = ssub.s32 %s17, %s24
      %p26 = scmp.eq.s32.totalorder %s25, 0
      %s28 = sadd.s32 %s27, 1
      %s29 = scalar_select %p26, %s27, %s28
      %p32 = pneg %p26
      %p33 = scmp.eq.s32.totalorder %s17, 1
      %p34 = por %p32, %p33
      %p35 = scmp.ne.s32.totalorder %s27, %s30
      %p36 = scmp.eq.s32.totalorder %s17, 0
      %p37 = por %p35, %p36
      %p38 = scmp.ne.s32.totalorder %s27, %s30
      %p39 = scmp.eq.s32.totalorder %s22, 1
      %p40 = por %p38, %p39
      %p41 = scmp.ne.s32.totalorder %s30, %s31
      %p42 = scmp.eq.s32.totalorder %s22, 0
      %p43 = por %p41, %p42
      %p44 = scmp.ne.s32.totalorder %s30, %s31
      %p45 = scmp.eq.s32.totalorder %s23, 1
      %p46 = por %p44, %p45
      %p48 = scmp.ne.s32.totalorder %s31, %s47
      %p49 = scmp.eq.s32.totalorder %s23, 0
      %p50 = por %p48, %p49
      %s52 = sadd.s32 %s51, 1
      %p55 = scmp.eq.s32.totalorder %s17, 1
      %p56 = scmp.ne.s32.totalorder %s51, %s53
      %p57 = scmp.eq.s32.totalorder %s17, 0
      %p58 = por %p56, %p57
      %p59 = scmp.ne.s32.totalorder %s51, %s53
      %p60 = scmp.eq.s32.totalorder %s22, 1
      %p61 = por %p59, %p60
      %p62 = scmp.ne.s32.totalorder %s53, %s54
      %p63 = scmp.eq.s32.totalorder %s22, 0
      %p64 = por %p62, %p63
      %p65 = scmp.ne.s32.totalorder %s53, %s54
      %p66 = scmp.eq.s32.totalorder %s23, 1
      %p67 = por %p65, %p66
      %p69 = scmp.ne.s32.totalorder %s54, %s68
      %p70 = scmp.eq.s32.totalorder %s23, 0
      %p71 = por %p69, %p70
      %s73 = sadd.s32 %s72, 1
      %p76 = scmp.eq.s32.totalorder %s17, 1
      %p77 = scmp.ne.s32.totalorder %s72, %s74
      %p78 = scmp.eq.s32.totalorder %s17, 0
      %p79 = por %p77, %p78
      %p80 = scmp.ne.s32.totalorder %s72, %s74
      %p81 = scmp.eq.s32.totalorder %s22, 1
      %p82 = por %p80, %p81
      %p83 = scmp.ne.s32.totalorder %s74, %s75
      %p84 = scmp.eq.s32.totalorder %s22, 0
      %p85 = por %p83, %p84
      %p86 = scmp.ne.s32.totalorder %s74, %s75
      %p87 = scmp.eq.s32.totalorder %s23, 1
      %p88 = por %p86, %p87
      %p90 = scmp.ne.s32.totalorder %s75, %s89
      %p91 = scmp.eq.s32.totalorder %s23, 0
      %p92 = por %p90, %p91
      %s94 = sadd.s32 %s93, 1
      %p97 = scmp.eq.s32.totalorder %s17, 1
      %p98 = scmp.ne.s32.totalorder %s93, %s95
      %p99 = scmp.eq.s32.totalorder %s17, 0
      %p100 = por %p98, %p99
      %p101 = scmp.ne.s32.totalorder %s93, %s95
      %p102 = scmp.eq.s32.totalorder %s22, 1
      %p103 = por %p101, %p102
      %p104 = scmp.ne.s32.totalorder %s95, %s96
      %p105 = scmp.eq.s32.totalorder %s22, 0
      %p106 = por %p104, %p105
      %p107 = scmp.ne.s32.totalorder %s95, %s96
      %p108 = scmp.eq.s32.totalorder %s23, 1
      %p109 = por %p107, %p108
      %p111 = scmp.ne.s32.totalorder %s96, %s110
      %p112 = scmp.eq.s32.totalorder %s23, 0
      %p113 = por %p111, %p112
      %s115 = sadd.s32 %s114, 1
      %p118 = scmp.eq.s32.totalorder %s17, 1
      %p119 = scmp.ne.s32.totalorder %s114, %s116
      %p120 = scmp.eq.s32.totalorder %s17, 0
      %p121 = por %p119, %p120
      %p122 = scmp.ne.s32.totalorder %s114, %s116
      %p123 = scmp.eq.s32.totalorder %s22, 1
      %p124 = por %p122, %p123
      %p125 = scmp.ne.s32.totalorder %s116, %s117
      %p126 = scmp.eq.s32.totalorder %s22, 0
      %p127 = por %p125, %p126
      %p128 = scmp.ne.s32.totalorder %s116, %s117
      %p129 = scmp.eq.s32.totalorder %s23, 1
      %p130 = por %p128, %p129
      %p132 = scmp.ne.s32.totalorder %s117, %s131
      %p133 = scmp.eq.s32.totalorder %s23, 0
      %p134 = por %p132, %p133
      %s136 = sadd.s32 %s135, 1
      %p139 = scmp.eq.s32.totalorder %s17, 1
      %p140 = scmp.ne.s32.totalorder %s135, %s137
      %p141 = scmp.eq.s32.totalorder %s17, 0
      %p142 = por %p140, %p141
      %p143 = scmp.ne.s32.totalorder %s135, %s137
      %p144 = scmp.eq.s32.totalorder %s22, 1
      %p145 = por %p143, %p144
      %p146 = scmp.ne.s32.totalorder %s137, %s138
      %p147 = scmp.eq.s32.totalorder %s22, 0
      %p148 = por %p146, %p147
      %p149 = scmp.ne.s32.totalorder %s137, %s138
      %p150 = scmp.eq.s32.totalorder %s23, 1
      %p151 = por %p149, %p150
      %p153 = scmp.ne.s32.totalorder %s138, %s152
      %p154 = scmp.eq.s32.totalorder %s23, 0
      %p155 = por %p153, %p154
      %s157 = sadd.s32 %s156, 1
      %p160 = scmp.eq.s32.totalorder %s17, 1
      %p161 = scmp.ne.s32.totalorder %s156, %s158
      %p162 = scmp.eq.s32.totalorder %s17, 0
      %p163 = por %p161, %p162
      %p164 = scmp.ne.s32.totalorder %s156, %s158
      %p165 = scmp.eq.s32.totalorder %s22, 1
      %p166 = por %p164, %p165
      %p167 = scmp.ne.s32.totalorder %s158, %s159
      %p168 = scmp.eq.s32.totalorder %s22, 0
      %p169 = por %p167, %p168
      %p170 = scmp.ne.s32.totalorder %s158, %s159
      %p171 = scmp.eq.s32.totalorder %s23, 1
      %p172 = por %p170, %p171
      %p174 = scmp.ne.s32.totalorder %s159, %s173
      %p175 = scmp.eq.s32.totalorder %s23, 0
      %p176 = por %p174, %p175
      %s177 = ssub.s32 %s17, %s24
      %p178 = scmp.eq.s32.totalorder %s177, 0
      %s180 = sadd.s32 %s179, 1
      %s181 = scalar_select %p178, %s179, %s180
      %p184 = pneg %p178
      %p185 = scmp.eq.s32.totalorder %s17, 1
      %p186 = por %p184, %p185
      %p187 = scmp.ne.s32.totalorder %s179, %s182
      %p188 = scmp.eq.s32.totalorder %s17, 0
      %p189 = por %p187, %p188
      %p190 = scmp.ne.s32.totalorder %s179, %s182
      %p191 = scmp.eq.s32.totalorder %s22, 1
      %p192 = por %p190, %p191
      %p193 = scmp.ne.s32.totalorder %s182, %s183
      %p194 = scmp.eq.s32.totalorder %s22, 0
      %p195 = por %p193, %p194
      %p196 = scmp.ne.s32.totalorder %s182, %s183
      %p197 = scmp.eq.s32.totalorder %s23, 1
      %p198 = por %p196, %p197
      %p200 = scmp.ne.s32.totalorder %s183, %s199
      %p201 = scmp.eq.s32.totalorder %s23, 0
      %p202 = por %p200, %p201
      %p203 = scmp.le.s32.totalorder 1, %s17
      %p204 = scmp.lt.s32.totalorder %s17, 3
      %p205 = pnand %p203, %p204
      %p206 = pneg %p205
      // Predicated region
      $region9: #{tpu_custom_call.1} parent=5 // pred_check
        _
      $region10: #{tpu_custom_call.1} parent=5 // pred_check_branch
        %208 = sbr.rel (%p205) target = $region12
      $region11: #{tpu_custom_call.1} parent=5 // pred_region
        %s209 = ssub.s32 %s17, 1
        // Predicated region
        $region13: #{tpu_custom_call.1} parent=11 // pred_check
          %p210 = pneg %p64
        $region14: #{tpu_custom_call.1} parent=11 // pred_check_branch
          %212 = sbr.rel (%p210) target = $region16
        $region15: #{tpu_custom_call.1} parent=11 // pred_region
          _
        $region16: #{tpu_custom_call.1} parent=11 // pred_fallthru
          _
        // Predicated region
        $region17: #{tpu_custom_call.1} parent=11 // pred_check
          %p213 = pneg %p85
        $region18: #{tpu_custom_call.1} parent=11 // pred_check_branch
          %215 = sbr.rel (%p213) target = $region20
        $region19: #{tpu_custom_call.1} parent=11 // pred_region
          _
        $region20: #{tpu_custom_call.1} parent=11 // pred_fallthru
          _
        // Predicated region
        $region21: #{tpu_custom_call.1} parent=11 // pred_check
          %p216 = pneg %p106
        $region22: #{tpu_custom_call.1} parent=11 // pred_check_branch
          %218 = sbr.rel (%p216) target = $region24
        $region23: #{tpu_custom_call.1} parent=11 // pred_region
          %s220 = ssub.s32 512, 512
          %221 = vsyncadd [#allocation3], %s220
          %s222 = sshll.u32 [#allocation2], 4
          %s223 = int_to_ptr.vmem [resolvable:$true] %s222
          %228 = dma.hbm_to_vmem [thread:$0]  %s3, 512, %s223, [#allocation3], 64, 64, 4
        $region24: #{tpu_custom_call.1} parent=11 // pred_fallthru
          _
        // Predicated region
        $region25: #{tpu_custom_call.1} parent=11 // pred_check
          %p229 = pneg %p127
        $region26: #{tpu_custom_call.1} parent=11 // pred_check_branch
          %231 = sbr.rel (%p229) target = $region28
        $region27: #{tpu_custom_call.1} parent=11 // pred_region
          _
        $region28: #{tpu_custom_call.1} parent=11 // pred_fallthru
          _
        // Predicated region
        $region29: #{tpu_custom_call.1} parent=11 // pred_check
          %p232 = pneg %p148
        $region30: #{tpu_custom_call.1} parent=11 // pred_check_branch
          %234 = sbr.rel (%p232) target = $region32
        $region31: #{tpu_custom_call.1} parent=11 // pred_region
          _
        $region32: #{tpu_custom_call.1} parent=11 // pred_fallthru
          _
        // Predicated region
        $region33: #{tpu_custom_call.1} parent=11 // pred_check
          %p235 = pneg %p169
        $region34: #{tpu_custom_call.1} parent=11 // pred_check_branch
          %237 = sbr.rel (%p235) target = $region36
        $region35: #{tpu_custom_call.1} parent=11 // pred_region
          _
        $region36: #{tpu_custom_call.1} parent=11 // pred_fallthru
          _
      $region12: #{tpu_custom_call.1} parent=5 // pred_fallthru
        _
      %p238 = scmp.lt.s32.totalorder %s17, 2
      // Predicated region
      $region37: #{tpu_custom_call.1} parent=5 // pred_check
        %p239 = pneg %p238
      $region38: #{tpu_custom_call.1} parent=5 // pred_check_branch
        %241 = sbr.rel (%p239) target = $region40
      $region39: #{tpu_custom_call.1} parent=5 // pred_region
        // Predicated region
        $region41: #{tpu_custom_call.1} parent=39 // pred_check
          %p242 = pneg %p37
        $region42: #{tpu_custom_call.1} parent=39 // pred_check_branch
          %244 = sbr.rel (%p242) target = $region44
        $region43: #{tpu_custom_call.1} parent=39 // pred_region
          %s245 = smul.u32 2, %s17
          %p246 = scmp.lt.s32.totalorder %s245, 3
          %s247 = scalar_select %p246, %s245, 3
          %s248 = smul.addr %s247, 8
          %s249 = scalar_lea.vmem %s0, %s248
          %s250 = smul.u32 2, %s17
        $region44: #{tpu_custom_call.1} parent=39 // pred_fallthru
          _
      $region40: #{tpu_custom_call.1} parent=5 // pred_fallthru
        _
      %p251 = scmp.le.s32.totalorder 1, %s17
      %p252 = scmp.lt.s32.totalorder %s17, 3
      %p253 = pnand %p251, %p252
      %p254 = pneg %p253
      // Predicated region
      $region45: #{tpu_custom_call.1} parent=5 // pred_check
        _
      $region46: #{tpu_custom_call.1} parent=5 // pred_check_branch
        %256 = sbr.rel (%p253) target = $region48
      $region47: #{tpu_custom_call.1} parent=5 // pred_region
        %s257 = ssub.s32 %s17, 1
        // Predicated region
        $region49: #{tpu_custom_call.1} parent=47 // pred_check
          %p258 = pneg %p106
        $region50: #{tpu_custom_call.1} parent=47 // pred_check_branch
          %260 = sbr.rel (%p258) target = $region52
        $region51: #{tpu_custom_call.1} parent=47 // pred_region
          %261 = dma.done [#allocation3], 512
        $region52: #{tpu_custom_call.1} parent=47 // pred_fallthru
          _
        %s262 = smul.u32 2, %s22
        %p263 = scmp.lt.s32.totalorder %s262, 3
        %s264 = scalar_select %p263, %s262, 3
        %s265 = smul.addr %s264, 8
        %s266 = scalar_lea.vmem %s0, %s265
        %p267 = pneg %p43
        %p268 = pneg %p40
        %p269 = pneg %p64
        %p270 = pneg %p61
        %p271 = pneg %p85
        %p272 = pneg %p82
        %p273 = pneg %p106
        %p274 = pneg %p103
        %p275 = pneg %p127
        %p276 = pneg %p124
        %p277 = pneg %p148
        %p278 = pneg %p145
        %p279 = pneg %p169
        %p280 = pneg %p166
        %p281 = pneg %p195
        %p282 = pneg %p192
        %s283 = sand.u32 %s182, 1
        %s284 = scalar_lea.sflag [#allocation4], %s283
        %s285 = sand.u32 %s182, 1
        %s286 = smul.addr %s285, 16
        %s287 = scalar_lea.vmem [#allocation5], %s286
        %s288 = smul.u32 2, %s22
        %p289 = scmp.lt.s32.totalorder %s288, 3
        %s290 = scalar_select %p289, %s288, 3
        %s291 = smul.addr %s290, 8
        %s292 = scalar_lea.vmem %s0, %s291
        %s293 = smul.u32 2, %s22
        %s294 = smul.u32 2, %s22
        %v296 = vld [vmem:[%s292] sm:$0xff]
        %v297 = vld [vmem:[%s292 + $0x8] sm:$0xff]
        %v298 = vpack.c.bf16 %v297, %v296
        %v299 = vld [vmem:[%s1] sm:$0xf]
        %v300 = vld [vmem:[%s1 + $0x4] sm:$0xf]
        %v301 = vld [vmem:[%s1 + $0x8] sm:$0xf]
        %v302 = vld [vmem:[%s1 + $0xc] sm:$0xf]
        %v303 = vld [vmem:[%s2] sm:$0x1]
        %v305 = vlaneseq
        %v306 = vshrl.u32 %v305, 7
        %v307 = vsub.s32 0, %v306
        %v308 = vrot.slane %v303, %v307
        %v314 = vunpack.c.l.b16 %v299
        %v315 = vunpack.c.l.b16 %v300
        %v316 = vunpack.c.l.b16 %v301
        %v317 = vunpack.c.l.b16 %v302
        %v318 = vpack.c.b16 %v315, %v314
        %v319 = vpack.c.b16 %v317, %v316
        %vm322 = vcmask 261120
        %v324 = vsel %vm322, %v298, 0
        %326 = vmatprep.subr.bf16.mxu0 0
        %327 = vmatpush1.bf16.msra.mxu0 %v318
        %328 = vmatprep.subr.bf16.mxu0 0
        %329 = vmatpush1.bf16.msra.mxu0 %v319
        %330 = vmatprep.subr.bf16.mxu0 0
        %331 = vmatpush1.bf16.msra.mxu0 0
        %332 = vmatprep.subr.bf16.mxu0 0
        %333 = vmatpush1.bf16.msra.mxu0 0
        %334 = vmatprep.subr.bf16.mxu0 0
        %335 = vmatpush1.bf16.msra.mxu0 0
        %336 = vmatprep.subr.bf16.mxu0 0
        %337 = vmatpush1.bf16.msra.mxu0 0
        %338 = vmatprep.subr.bf16.mxu0 0
        %339 = vmatpush1.bf16.msra.mxu0 0
        %340 = vmatprep.subr.bf16.mxu0 0
        %341 = vmatpush1.bf16.msra.mxu0 0
        %342 = vmatprep.subr.bf16.mxu0 0
        %343 = vmatpush1.bf16.msra.mxu0 0
        %344 = vmatprep.subr.bf16.mxu0 0
        %345 = vmatpush1.bf16.msra.mxu0 0
        %346 = vmatprep.subr.bf16.mxu0 0
        %347 = vmatpush1.bf16.msra.mxu0 0
        %348 = vmatprep.subr.bf16.mxu0 0
        %349 = vmatpush1.bf16.msra.mxu0 0
        %350 = vmatprep.subr.bf16.mxu0 0
        %351 = vmatpush1.bf16.msra.mxu0 0
        %352 = vmatprep.subr.bf16.mxu0 0
        %353 = vmatpush1.bf16.msra.mxu0 0
        %354 = vmatprep.subr.bf16.mxu0 0
        %355 = vmatpush1.bf16.msra.mxu0 0
        %356 = vmatprep.subr.bf16.mxu0 0
        %357 = vmatpush1.bf16.msra.mxu0 0
        %358 = vmatprep.mubr.bf16.mxu0 0
        %359 = vmatmul.mubr.bf16.gmra.mrb[0].mxu0 %v324
        %v360 = vpop.f32.mrb[0].mxu0
        %v361 = vadd.f32 %v308, %v360
        %v362 = vpop.f32.mrb[0].mxu0
        %v363 = vpop.f32.mrb[0].mxu0
        %v364 = vadd.f32 %v308, %v363
        %v365 = vpop.f32.mrb[0].mxu0
        %366 = vdwg.mxu0
        %v367 = vmax.f32 %v361, 0.0
        %v368 = vmax.f32 %v364, 0.0
        %v369 = vpack.c.bf16 %v368, %v367
        %v370 = vld [vmem:[#allocation2] sm:$0xf]
        %v371 = vld [vmem:[#allocation2 + $0x4] sm:$0xf]
        %v372 = vld [vmem:[#allocation2 + $0x8] sm:$0xf]
        %v373 = vld [vmem:[#allocation2 + $0xc] sm:$0xf]
        %v374 = vld [vmem:[#allocation2 + $0x10] sm:$0xf]
        %v375 = vld [vmem:[#allocation2 + $0x14] sm:$0xf]
        %v376 = vld [vmem:[#allocation2 + $0x18] sm:$0xf]
        %v377 = vld [vmem:[#allocation2 + $0x1c] sm:$0xf]
        %v378 = vld [vmem:[%s4] sm:$0x1]
        %v380 = vlaneseq
        %v381 = vshrl.u32 %v380, 7
        %v382 = vsub.s32 0, %v381
        %v383 = vrot.slane %v378, %v382
        %v393 = vunpack.c.l.b16 %v370
        %v394 = vunpack.c.l.b16 %v371
        %v395 = vunpack.c.l.b16 %v372
        %v396 = vunpack.c.l.b16 %v373
        %v397 = vunpack.c.l.b16 %v374
        %v398 = vunpack.c.l.b16 %v375
        %v399 = vunpack.c.l.b16 %v376
        %v400 = vunpack.c.l.b16 %v377
        %v401 = vpack.c.b16 %v394, %v393
        %v402 = vpack.c.b16 %v396, %v395
        %v403 = vpack.c.b16 %v398, %v397
        %v404 = vpack.c.b16 %v400, %v399
        %vm409 = vcmask 523264
        %v411 = vsel %vm409, %v369, 0
        %413 = vmatprep.subr.bf16.mxu0 0
        %414 = vmatpush1.bf16.msra.mxu0 %v401
        %415 = vmatprep.subr.bf16.mxu0 0
        %416 = vmatpush1.bf16.msra.mxu0 %v402
        %417 = vmatprep.subr.bf16.mxu0 0
        %418 = vmatpush1.bf16.msra.mxu0 %v403
        %419 = vmatprep.subr.bf16.mxu0 0
        %420 = vmatpush1.bf16.msra.mxu0 %v404
        %421 = vmatprep.subr.bf16.mxu0 0
        %422 = vmatpush1.bf16.msra.mxu0 0
        %423 = vmatprep.subr.bf16.mxu0 0
        %424 = vmatpush1.bf16.msra.mxu0 0
        %425 = vmatprep.subr.bf16.mxu0 0
        %426 = vmatpush1.bf16.msra.mxu0 0
        %427 = vmatprep.subr.bf16.mxu0 0
        %428 = vmatpush1.bf16.msra.mxu0 0
        %429 = vmatprep.subr.bf16.mxu0 0
        %430 = vmatpush1.bf16.msra.mxu0 0
        %431 = vmatprep.subr.bf16.mxu0 0
        %432 = vmatpush1.bf16.msra.mxu0 0
        %433 = vmatprep.subr.bf16.mxu0 0
        %434 = vmatpush1.bf16.msra.mxu0 0
        %435 = vmatprep.subr.bf16.mxu0 0
        %436 = vmatpush1.bf16.msra.mxu0 0
        %437 = vmatprep.subr.bf16.mxu0 0
        %438 = vmatpush1.bf16.msra.mxu0 0
        %439 = vmatprep.subr.bf16.mxu0 0
        %440 = vmatpush1.bf16.msra.mxu0 0
        %441 = vmatprep.subr.bf16.mxu0 0
        %442 = vmatpush1.bf16.msra.mxu0 0
        %443 = vmatprep.subr.bf16.mxu0 0
        %444 = vmatpush1.bf16.msra.mxu0 0
        %445 = vmatprep.mubr.bf16.mxu0 0
        %446 = vmatmul.mubr.bf16.gmra.mrb[0].mxu0 %v411
        %v447 = vpop.f32.mrb[0].mxu0
        %v448 = vadd.f32 %v383, %v447
        %v449 = vpop.f32.mrb[0].mxu0
        %v450 = vpop.f32.mrb[0].mxu0
        %v451 = vadd.f32 %v383, %v450
        %v452 = vpop.f32.mrb[0].mxu0
        %453 = vdwg.mxu0
        %v454 = vmax.f32 %v448, 0.0
        %v455 = vmax.f32 %v451, 0.0
        %v456 = vpack.c.bf16 %v455, %v454
        %v457 = vld [vmem:[%s5] sm:$0xf]
        %v458 = vld [vmem:[%s5 + $0x4] sm:$0xf]
        %v459 = vld [vmem:[%s5 + $0x8] sm:$0xf]
        %v460 = vld [vmem:[%s5 + $0xc] sm:$0xf]
        %v461 = vld [vmem:[%s5 + $0x10] sm:$0xf]
        %v462 = vld [vmem:[%s5 + $0x14] sm:$0xf]
        %v463 = vld [vmem:[%s5 + $0x18] sm:$0xf]
        %v464 = vld [vmem:[%s5 + $0x1c] sm:$0xf]
        %v465 = vld [vmem:[%s6] sm:$0x1]
        %v467 = vlaneseq
        %v468 = vshrl.u32 %v467, 7
        %v469 = vsub.s32 0, %v468
        %v470 = vrot.slane %v465, %v469
        %v480 = vunpack.c.l.b16 %v457
        %v481 = vunpack.c.l.b16 %v458
        %v482 = vunpack.c.l.b16 %v459
        %v483 = vunpack.c.l.b16 %v460
        %v484 = vunpack.c.l.b16 %v461
        %v485 = vunpack.c.l.b16 %v462
        %v486 = vunpack.c.l.b16 %v463
        %v487 = vunpack.c.l.b16 %v464
        %v488 = vpack.c.b16 %v481, %v480
        %v489 = vpack.c.b16 %v483, %v482
        %v490 = vpack.c.b16 %v485, %v484
        %v491 = vpack.c.b16 %v487, %v486
        %v497 = vsel %vm409, %v456, 0
        %499 = vmatprep.subr.bf16.mxu0 0
        %500 = vmatpush1.bf16.msra.mxu0 %v488
        %501 = vmatprep.subr.bf16.mxu0 0
        %502 = vmatpush1.bf16.msra.mxu0 %v489
        %503 = vmatprep.subr.bf16.mxu0 0
        %504 = vmatpush1.bf16.msra.mxu0 %v490
        %505 = vmatprep.subr.bf16.mxu0 0
        %506 = vmatpush1.bf16.msra.mxu0 %v491
        %507 = vmatprep.subr.bf16.mxu0 0
        %508 = vmatpush1.bf16.msra.mxu0 0
        %509 = vmatprep.subr.bf16.mxu0 0
        %510 = vmatpush1.bf16.msra.mxu0 0
        %511 = vmatprep.subr.bf16.mxu0 0
        %512 = vmatpush1.bf16.msra.mxu0 0
        %513 = vmatprep.subr.bf16.mxu0 0
        %514 = vmatpush1.bf16.msra.mxu0 0
        %515 = vmatprep.subr.bf16.mxu0 0
        %516 = vmatpush1.bf16.msra.mxu0 0
        %517 = vmatprep.subr.bf16.mxu0 0
        %518 = vmatpush1.bf16.msra.mxu0 0
        %519 = vmatprep.subr.bf16.mxu0 0
        %520 = vmatpush1.bf16.msra.mxu0 0
        %521 = vmatprep.subr.bf16.mxu0 0
        %522 = vmatpush1.bf16.msra.mxu0 0
        %523 = vmatprep.subr.bf16.mxu0 0
        %524 = vmatpush1.bf16.msra.mxu0 0
        %525 = vmatprep.subr.bf16.mxu0 0
        %526 = vmatpush1.bf16.msra.mxu0 0
        %527 = vmatprep.subr.bf16.mxu0 0
        %528 = vmatpush1.bf16.msra.mxu0 0
        %529 = vmatprep.subr.bf16.mxu0 0
        %530 = vmatpush1.bf16.msra.mxu0 0
        %531 = vmatprep.mubr.bf16.mxu0 0
        %532 = vmatmul.mubr.bf16.gmra.mrb[0].mxu0 %v497
        %v533 = vpop.f32.mrb[0].mxu0
        %v534 = vadd.f32 %v470, %v533
        %v535 = vpop.f32.mrb[0].mxu0
        %v536 = vpop.f32.mrb[0].mxu0
        %v537 = vadd.f32 %v470, %v536
        %v538 = vpop.f32.mrb[0].mxu0
        %539 = vdwg.mxu0
        %540 = vst.msk [vmem:[%s287] sm:$0xff] %vm322, %v534
        %541 = vst.msk [vmem:[%s287 + $0x8] sm:$0xff] %vm322, %v537
        %s542 = sand.u32 %s182, 1
        %s543 = scalar_lea.sflag [#allocation4], %s542
        %s544 = sand.u32 %s182, 1
        %s545 = smul.addr %s544, 16
        %s546 = scalar_lea.vmem [#allocation5], %s545
        // Predicated region
        $region53: #{tpu_custom_call.1} parent=47 // pred_check
          %p547 = pneg %p192
        $region54: #{tpu_custom_call.1} parent=47 // pred_check_branch
          %549 = sbr.rel (%p547) target = $region56
        $region55: #{tpu_custom_call.1} parent=47 // pred_region
          %s550 = smul.u32 2, %s22
          %s552 = ssub.s32 256, 256
          %553 = vsyncadd %s543, %s552
          %s554 = smul.addr %s550, 128
          %s555 = scalar_lea.hbm %s7, %s554
          %s556 = sshll.u32 %s546, 4
          %s557 = int_to_ptr.vmem [resolvable:$true] %s556
          %562 = dma.vmem_to_hbm [thread:$0]  %s557, 256, %s555, %s543, 128, 128, 8
        $region56: #{tpu_custom_call.1} parent=47 // pred_fallthru
          _
      $region48: #{tpu_custom_call.1} parent=5 // pred_fallthru
        _
      %p563 = scmp.le.s32.totalorder 2, %s17
      // Predicated region
      $region57: #{tpu_custom_call.1} parent=5 // pred_check
        %p564 = pneg %p563
      $region58: #{tpu_custom_call.1} parent=5 // pred_check_branch
        %566 = sbr.rel (%p564) target = $region60
      $region59: #{tpu_custom_call.1} parent=5 // pred_region
        %s567 = ssub.s32 %s17, 2
        // Predicated region
        $region61: #{tpu_custom_call.1} parent=59 // pred_check
          %p568 = pneg %p198
        $region62: #{tpu_custom_call.1} parent=59 // pred_check_branch
          %570 = sbr.rel (%p568) target = $region64
        $region63: #{tpu_custom_call.1} parent=59 // pred_region
          %s571 = sand.u32 %s183, 1
          %s572 = scalar_lea.sflag [#allocation4], %s571
          %s573 = sand.u32 %s183, 1
          %s574 = smul.addr %s573, 16
          %s575 = scalar_lea.vmem [#allocation5], %s574
          %576 = dma.done %s572, 256
        $region64: #{tpu_custom_call.1} parent=59 // pred_fallthru
          _
      $region60: #{tpu_custom_call.1} parent=5 // pred_fallthru
        _
    $region6: #{tpu_custom_call.1} parent=1 // loop_footer
      %s21 = sadd.s32 1, %s17
    $region7: #{tpu_custom_call.1} parent=1 // loop_footer_branch
      %16 = sbr.rel target = $region3
    $region8: #{tpu_custom_call.1} parent=1 // loop_exit
      _
    %577 = vsyncpa [#allocation3], 1
    %s578 = scalar_lea.sflag [#allocation3], 1
    %579 = vsyncpa %s578, 1
    %580 = vsyncpa [#allocation4], 1
    %s581 = scalar_lea.sflag [#allocation4], 1
    %582 = vsyncpa %s581, 1

// kernel: tpu_custom_call.1
$region0: #{tpu_custom_call.1}
  #allocation0 [shape = 'u32[]', space=smem, size = 0x4, offset = 0x4, fixed_abs, tag = 'smem constant byte address 0x4 - core index']
  #allocation1 [shape = 'u32[144,128]{1,0:T(1,128)}', space=vmem, size = 0x12000, scoped, tag = 'internal scratch']
  %s0 = inlined_call_operand.vmem [shape: f32[32,32], index: 0, kind: input, shape index: {}]
  %s1 = inlined_call_operand.vmem [shape: bf16[32,64], index: 1, kind: input, shape index: {}]
  %s2 = inlined_call_operand.vmem [shape: f32[1,64], index: 2, kind: input, shape index: {}]
  %s3 = inlined_call_operand.hbm [shape: bf16[64,64], index: 3, kind: input, shape index: {}]
  %s4 = inlined_call_operand.vmem [shape: f32[1,64], index: 4, kind: input, shape index: {}]
  %s5 = inlined_call_operand.vmem [shape: bf16[64,32], index: 5, kind: input, shape index: {}]
  %s6 = inlined_call_operand.vmem [shape: f32[1,32], index: 6, kind: input, shape index: {}]
  %s7 = inlined_call_operand.hbm [shape: f32[32,32], index: 7, kind: output, shape index: {}]
  %s8 = sld [smem:[#allocation0]]
  $region65: #{tpu_custom_call.1} parent=0
    _
  %s10 = ssub.s32 1, %s8
  %s11 = scalar_select 0, %s10, %s8
  $region1: #{tpu_custom_call.1} parent=0
    #allocation2 [shape = 'u8[16384]{0}', space=vmem, size = 0x4000, scoped, tag = 'input window, operand 3, single buffered']
    #allocation3 [shape = 's32[2]{0}', space=sflag, size = 0x8, scoped, tag = 'scoped memory for tpu_custom_call.1']
    #allocation4 [shape = 's32[2]{0}', space=sflag, size = 0x8, scoped, tag = 'scoped memory for tpu_custom_call.1']
    #allocation5 [shape = 'u8[16384]{0}', space=vmem, size = 0x4000, scoped, tag = 'output window, operand 0']
    %12 = vsyncpa [#allocation3], 0
    %13 = vsyncpa [#allocation4], 0
    %s14 = scalar_lea.sflag [#allocation4], 1
    %15 = vsyncpa %s14, 0
    loop: start=0, step=1, limit=4
    $region2: #{tpu_custom_call.1} parent=1 // loop_pre_header
      _
    $region3: #{tpu_custom_call.1} parent=1 // loop_header
      %s17 = sphi 0, %s21
      %p18 = scmp.ge.s32.totalorder %s17, 4
      %s27 = sphi 0, %s29
      %s30 = sphi 0, %s27
      %s31 = sphi 0, %s30
      %s47 = sphi 0, %s31
      %s51 = sphi 0, %s51
      %s53 = sphi 0, %s51
      %s54 = sphi 0, %s53
      %s68 = sphi 0, %s54
      %s72 = sphi 0, %s72
      %s74 = sphi 0, %s72
      %s75 = sphi 0, %s74
      %s89 = sphi 0, %s75
      %s93 = sphi 0, %s93
      %s95 = sphi 0, %s93
      %s96 = sphi 0, %s95
      %s110 = sphi 0, %s96
      %s114 = sphi 0, %s114
      %s116 = sphi 0, %s114
      %s117 = sphi 0, %s116
      %s131 = sphi 0, %s117
      %s135 = sphi 0, %s135
      %s137 = sphi 0, %s135
      %s138 = sphi 0, %s137
      %s152 = sphi 0, %s138
      %s156 = sphi 0, %s156
      %s158 = sphi 0, %s156
      %s159 = sphi 0, %s158
      %s173 = sphi 0, %s159
      %s179 = sphi 0, %s181
      %s182 = sphi 0, %s179
      %s183 = sphi 0, %s182
      %s199 = sphi 0, %s183
    $region4: #{tpu_custom_call.1} parent=1 // loop_header_branch
      %20 = sbr.rel (%p18) target = $region8
    $region5: #{tpu_custom_call.1} parent=1 // loop_body
      %s22 = ssub.s32 %s17, 1
      %s23 = ssub.s32 %s17, 2
      %s24 = sadd.s32 %s17, 1
      %s25 = ssub.s32 %s17, %s24
      %p26 = scmp.eq.s32.totalorder %s25, 0
      %s28 = sadd.s32 %s27, 1
      %s29 = scalar_select %p26, %s27, %s28
      %p32 = pneg %p26
      %p33 = scmp.eq.s32.totalorder %s17, 1
      %p34 = por %p32, %p33
      %p35 = scmp.ne.s32.totalorder %s27, %s30
      %p36 = scmp.eq.s32.totalorder %s17, 0
      %p37 = por %p35, %p36
      %p38 = scmp.ne.s32.totalorder %s27, %s30
      %p39 = scmp.eq.s32.totalorder %s22, 1
      %p40 = por %p38, %p39
      %p41 = scmp.ne.s32.totalorder %s30, %s31
      %p42 = scmp.eq.s32.totalorder %s22, 0
      %p43 = por %p41, %p42
      %p44 = scmp.ne.s32.totalorder %s30, %s31
      %p45 = scmp.eq.s32.totalorder %s23, 1
      %p46 = por %p44, %p45
      %p48 = scmp.ne.s32.totalorder %s31, %s47
      %p49 = scmp.eq.s32.totalorder %s23, 0
      %p50 = por %p48, %p49
      %s52 = sadd.s32 %s51, 1
      %p55 = scmp.eq.s32.totalorder %s17, 1
      %p56 = scmp.ne.s32.totalorder %s51, %s53
      %p57 = scmp.eq.s32.totalorder %s17, 0
      %p58 = por %p56, %p57
      %p59 = scmp.ne.s32.totalorder %s51, %s53
      %p60 = scmp.eq.s32.totalorder %s22, 1
      %p61 = por %p59, %p60
      %p62 = scmp.ne.s32.totalorder %s53, %s54
      %p63 = scmp.eq.s32.totalorder %s22, 0
      %p64 = por %p62, %p63
      %p65 = scmp.ne.s32.totalorder %s53, %s54
      %p66 = scmp.eq.s32.totalorder %s23, 1
      %p67 = por %p65, %p66
      %p69 = scmp.ne.s32.totalorder %s54, %s68
      %p70 = scmp.eq.s32.totalorder %s23, 0
      %p71 = por %p69, %p70
      %s73 = sadd.s32 %s72, 1
      %p76 = scmp.eq.s32.totalorder %s17, 1
      %p77 = scmp.ne.s32.totalorder %s72, %s74
      %p78 = scmp.eq.s32.totalorder %s17, 0
      %p79 = por %p77, %p78
      %p80 = scmp.ne.s32.totalorder %s72, %s74
      %p81 = scmp.eq.s32.totalorder %s22, 1
      %p82 = por %p80, %p81
      %p83 = scmp.ne.s32.totalorder %s74, %s75
      %p84 = scmp.eq.s32.totalorder %s22, 0
      %p85 = por %p83, %p84
      %p86 = scmp.ne.s32.totalorder %s74, %s75
      %p87 = scmp.eq.s32.totalorder %s23, 1
      %p88 = por %p86, %p87
      %p90 = scmp.ne.s32.totalorder %s75, %s89
      %p91 = scmp.eq.s32.totalorder %s23, 0
      %p92 = por %p90, %p91
      %s94 = sadd.s32 %s93, 1
      %p97 = scmp.eq.s32.totalorder %s17, 1
      %p98 = scmp.ne.s32.totalorder %s93, %s95
      %p99 = scmp.eq.s32.totalorder %s17, 0
      %p100 = por %p98, %p99
      %p101 = scmp.ne.s32.totalorder %s93, %s95
      %p102 = scmp.eq.s32.totalorder %s22, 1
      %p103 = por %p101, %p102
      %p104 = scmp.ne.s32.totalorder %s95, %s96
      %p105 = scmp.eq.s32.totalorder %s22, 0
      %p106 = por %p104, %p105
      %p107 = scmp.ne.s32.totalorder %s95, %s96
      %p108 = scmp.eq.s32.totalorder %s23, 1
      %p109 = por %p107, %p108
      %p111 = scmp.ne.s32.totalorder %s96, %s110
      %p112 = scmp.eq.s32.totalorder %s23, 0
      %p113 = por %p111, %p112
      %s115 = sadd.s32 %s114, 1
      %p118 = scmp.eq.s32.totalorder %s17, 1
      %p119 = scmp.ne.s32.totalorder %s114, %s116
      %p120 = scmp.eq.s32.totalorder %s17, 0
      %p121 = por %p119, %p120
      %p122 = scmp.ne.s32.totalorder %s114, %s116
      %p123 = scmp.eq.s32.totalorder %s22, 1
      %p124 = por %p122, %p123
      %p125 = scmp.ne.s32.totalorder %s116, %s117
      %p126 = scmp.eq.s32.totalorder %s22, 0
      %p127 = por %p125, %p126
      %p128 = scmp.ne.s32.totalorder %s116, %s117
      %p129 = scmp.eq.s32.totalorder %s23, 1
      %p130 = por %p128, %p129
      %p132 = scmp.ne.s32.totalorder %s117, %s131
      %p133 = scmp.eq.s32.totalorder %s23, 0
      %p134 = por %p132, %p133
      %s136 = sadd.s32 %s135, 1
      %p139 = scmp.eq.s32.totalorder %s17, 1
      %p140 = scmp.ne.s32.totalorder %s135, %s137
      %p141 = scmp.eq.s32.totalorder %s17, 0
      %p142 = por %p140, %p141
      %p143 = scmp.ne.s32.totalorder %s135, %s137
      %p144 = scmp.eq.s32.totalorder %s22, 1
      %p145 = por %p143, %p144
      %p146 = scmp.ne.s32.totalorder %s137, %s138
      %p147 = scmp.eq.s32.totalorder %s22, 0
      %p148 = por %p146, %p147
      %p149 = scmp.ne.s32.totalorder %s137, %s138
      %p150 = scmp.eq.s32.totalorder %s23, 1
      %p151 = por %p149, %p150
      %p153 = scmp.ne.s32.totalorder %s138, %s152
      %p154 = scmp.eq.s32.totalorder %s23, 0
      %p155 = por %p153, %p154
      %s157 = sadd.s32 %s156, 1
      %p160 = scmp.eq.s32.totalorder %s17, 1
      %p161 = scmp.ne.s32.totalorder %s156, %s158
      %p162 = scmp.eq.s32.totalorder %s17, 0
      %p163 = por %p161, %p162
      %p164 = scmp.ne.s32.totalorder %s156, %s158
      %p165 = scmp.eq.s32.totalorder %s22, 1
      %p166 = por %p164, %p165
      %p167 = scmp.ne.s32.totalorder %s158, %s159
      %p168 = scmp.eq.s32.totalorder %s22, 0
      %p169 = por %p167, %p168
      %p170 = scmp.ne.s32.totalorder %s158, %s159
      %p171 = scmp.eq.s32.totalorder %s23, 1
      %p172 = por %p170, %p171
      %p174 = scmp.ne.s32.totalorder %s159, %s173
      %p175 = scmp.eq.s32.totalorder %s23, 0
      %p176 = por %p174, %p175
      %s177 = ssub.s32 %s17, %s24
      %p178 = scmp.eq.s32.totalorder %s177, 0
      %s180 = sadd.s32 %s179, 1
      %s181 = scalar_select %p178, %s179, %s180
      %p184 = pneg %p178
      %p185 = scmp.eq.s32.totalorder %s17, 1
      %p186 = por %p184, %p185
      %p187 = scmp.ne.s32.totalorder %s179, %s182
      %p188 = scmp.eq.s32.totalorder %s17, 0
      %p189 = por %p187, %p188
      %p190 = scmp.ne.s32.totalorder %s179, %s182
      %p191 = scmp.eq.s32.totalorder %s22, 1
      %p192 = por %p190, %p191
      %p193 = scmp.ne.s32.totalorder %s182, %s183
      %p194 = scmp.eq.s32.totalorder %s22, 0
      %p195 = por %p193, %p194
      %p196 = scmp.ne.s32.totalorder %s182, %s183
      %p197 = scmp.eq.s32.totalorder %s23, 1
      %p198 = por %p196, %p197
      %p200 = scmp.ne.s32.totalorder %s183, %s199
      %p201 = scmp.eq.s32.totalorder %s23, 0
      %p202 = por %p200, %p201
      %p203 = scmp.le.s32.totalorder 1, %s17
      %p204 = scmp.lt.s32.totalorder %s17, 3
      %p205 = pnand %p203, %p204
      %p206 = pneg %p205
      // Predicated region
      $region9: #{tpu_custom_call.1} parent=5 // pred_check
        _
      $region10: #{tpu_custom_call.1} parent=5 // pred_check_branch
        %208 = sbr.rel (%p205) target = $region12
      $region11: #{tpu_custom_call.1} parent=5 // pred_region
        %s209 = ssub.s32 %s17, 1
        // Predicated region
        $region13: #{tpu_custom_call.1} parent=11 // pred_check
          %p210 = pneg %p64
        $region14: #{tpu_custom_call.1} parent=11 // pred_check_branch
          %212 = sbr.rel (%p210) target = $region16
        $region15: #{tpu_custom_call.1} parent=11 // pred_region
          _
        $region16: #{tpu_custom_call.1} parent=11 // pred_fallthru
          _
        // Predicated region
        $region17: #{tpu_custom_call.1} parent=11 // pred_check
          %p213 = pneg %p85
        $region18: #{tpu_custom_call.1} parent=11 // pred_check_branch
          %215 = sbr.rel (%p213) target = $region20
        $region19: #{tpu_custom_call.1} parent=11 // pred_region
          _
        $region20: #{tpu_custom_call.1} parent=11 // pred_fallthru
          _
        // Predicated region
        $region21: #{tpu_custom_call.1} parent=11 // pred_check
          %p216 = pneg %p106
        $region22: #{tpu_custom_call.1} parent=11 // pred_check_branch
          %218 = sbr.rel (%p216) target = $region24
        $region23: #{tpu_custom_call.1} parent=11 // pred_region
          %s220 = ssub.s32 512, 512
          %221 = vsyncadd [#allocation3], %s220
          %s222 = sshll.u32 [#allocation2], 4
          %s223 = int_to_ptr.vmem [resolvable:$true] %s222
          %228 = dma.hbm_to_vmem [thread:$0]  %s3, 512, %s223, [#allocation3], 64, 64, 4
        $region24: #{tpu_custom_call.1} parent=11 // pred_fallthru
          _
        // Predicated region
        $region25: #{tpu_custom_call.1} parent=11 // pred_check
          %p229 = pneg %p127
        $region26: #{tpu_custom_call.1} parent=11 // pred_check_branch
          %231 = sbr.rel (%p229) target = $region28
        $region27: #{tpu_custom_call.1} parent=11 // pred_region
          _
        $region28: #{tpu_custom_call.1} parent=11 // pred_fallthru
          _
        // Predicated region
        $region29: #{tpu_custom_call.1} parent=11 // pred_check
          %p232 = pneg %p148
        $region30: #{tpu_custom_call.1} parent=11 // pred_check_branch
          %234 = sbr.rel (%p232) target = $region32
        $region31: #{tpu_custom_call.1} parent=11 // pred_region
          _
        $region32: #{tpu_custom_call.1} parent=11 // pred_fallthru
          _
        // Predicated region
        $region33: #{tpu_custom_call.1} parent=11 // pred_check
          %p235 = pneg %p169
        $region34: #{tpu_custom_call.1} parent=11 // pred_check_branch
          %237 = sbr.rel (%p235) target = $region36
        $region35: #{tpu_custom_call.1} parent=11 // pred_region
          _
        $region36: #{tpu_custom_call.1} parent=11 // pred_fallthru
          _
      $region12: #{tpu_custom_call.1} parent=5 // pred_fallthru
        _
      %p238 = scmp.lt.s32.totalorder %s17, 2
      // Predicated region
      $region37: #{tpu_custom_call.1} parent=5 // pred_check
        %p239 = pneg %p238
      $region38: #{tpu_custom_call.1} parent=5 // pred_check_branch
        %241 = sbr.rel (%p239) target = $region40
      $region39: #{tpu_custom_call.1} parent=5 // pred_region
        // Predicated region
        $region41: #{tpu_custom_call.1} parent=39 // pred_check
          %p242 = pneg %p37
        $region42: #{tpu_custom_call.1} parent=39 // pred_check_branch
          %244 = sbr.rel (%p242) target = $region44
        $region43: #{tpu_custom_call.1} parent=39 // pred_region
          %s245 = smul.u32 2, %s17
          %p246 = scmp.lt.s32.totalorder %s245, 3
          %s247 = scalar_select %p246, %s245, 3
          %s248 = smul.addr %s247, 8
          %s249 = scalar_lea.vmem %s0, %s248
          %s250 = smul.u32 2, %s17
        $region44: #{tpu_custom_call.1} parent=39 // pred_fallthru
          _
      $region40: #{tpu_custom_call.1} parent=5 // pred_fallthru
        _
      %p251 = scmp.le.s32.totalorder 1, %s17
      %p252 = scmp.lt.s32.totalorder %s17, 3
      %p253 = pnand %p251, %p252
      %p254 = pneg %p253
      // Predicated region
      $region45: #{tpu_custom_call.1} parent=5 // pred_check
        _
      $region46: #{tpu_custom_call.1} parent=5 // pred_check_branch
        %256 = sbr.rel (%p253) target = $region48
      $region47: #{tpu_custom_call.1} parent=5 // pred_region
        %s257 = ssub.s32 %s17, 1
        // Predicated region
        $region49: #{tpu_custom_call.1} parent=47 // pred_check
          %p258 = pneg %p106
        $region50: #{tpu_custom_call.1} parent=47 // pred_check_branch
          %260 = sbr.rel (%p258) target = $region52
        $region51: #{tpu_custom_call.1} parent=47 // pred_region
          %261 = dma.done [#allocation3], 512
        $region52: #{tpu_custom_call.1} parent=47 // pred_fallthru
          _
        %s262 = smul.u32 2, %s22
        %p263 = scmp.lt.s32.totalorder %s262, 3
        %s264 = scalar_select %p263, %s262, 3
        %s265 = smul.addr %s264, 8
        %s266 = scalar_lea.vmem %s0, %s265
        %p267 = pneg %p43
        %p268 = pneg %p40
        %p269 = pneg %p64
        %p270 = pneg %p61
        %p271 = pneg %p85
        %p272 = pneg %p82
        %p273 = pneg %p106
        %p274 = pneg %p103
        %p275 = pneg %p127
        %p276 = pneg %p124
        %p277 = pneg %p148
        %p278 = pneg %p145
        %p279 = pneg %p169
        %p280 = pneg %p166
        %p281 = pneg %p195
        %p282 = pneg %p192
        %s283 = sand.u32 %s182, 1
        %s284 = scalar_lea.sflag [#allocation4], %s283
        %s285 = sand.u32 %s182, 1
        %s286 = smul.addr %s285, 16
        %s287 = scalar_lea.vmem [#allocation5], %s286
        %s288 = smul.u32 2, %s22
        %p289 = scmp.lt.s32.totalorder %s288, 3
        %s290 = scalar_select %p289, %s288, 3
        %s291 = smul.addr %s290, 8
        %s292 = scalar_lea.vmem %s0, %s291
        %s293 = smul.u32 2, %s22
        %s294 = smul.u32 2, %s22
        %v296 = vld [vmem:[%s292] sm:$0xff]
        %v297 = vld [vmem:[%s292 + $0x8] sm:$0xff]
        %v298 = vpack.c.bf16 %v297, %v296
        %v299 = vld [vmem:[%s1] sm:$0xf]
        %v300 = vld [vmem:[%s1 + $0x4] sm:$0xf]
        %v301 = vld [vmem:[%s1 + $0x8] sm:$0xf]
        %v302 = vld [vmem:[%s1 + $0xc] sm:$0xf]
        %v303 = vld [vmem:[%s2] sm:$0x1]
        %v305 = vlaneseq
        %v306 = vshrl.u32 %v305, 7
        %v307 = vsub.s32 0, %v306
        %v308 = vrot.slane %v303, %v307
        %v314 = vunpack.c.l.b16 %v299
        %v315 = vunpack.c.l.b16 %v300
        %v316 = vunpack.c.l.b16 %v301
        %v317 = vunpack.c.l.b16 %v302
        %v318 = vpack.c.b16 %v315, %v314
        %v319 = vpack.c.b16 %v317, %v316
        %vm322 = vcmask 261120
        %v324 = vsel %vm322, %v298, 0
        %326 = vmatprep.subr.bf16.mxu0 0
        %327 = vmatpush1.bf16.msra.mxu0 %v318
        %328 = vmatprep.subr.bf16.mxu0 0
        %329 = vmatpush1.bf16.msra.mxu0 %v319
        %330 = vmatprep.subr.bf16.mxu0 0
        %331 = vmatpush1.bf16.msra.mxu0 0
        %332 = vmatprep.subr.bf16.mxu0 0
        %333 = vmatpush1.bf16.msra.mxu0 0
        %334 = vmatprep.subr.bf16.mxu0 0
        %335 = vmatpush1.bf16.msra.mxu0 0
        %336 = vmatprep.subr.bf16.mxu0 0
        %337 = vmatpush1.bf16.msra.mxu0 0
        %338 = vmatprep.subr.bf16.mxu0 0
        %339 = vmatpush1.bf16.msra.mxu0 0
        %340 = vmatprep.subr.bf16.mxu0 0
        %341 = vmatpush1.bf16.msra.mxu0 0
        %342 = vmatprep.subr.bf16.mxu0 0
        %343 = vmatpush1.bf16.msra.mxu0 0
        %344 = vmatprep.subr.bf16.mxu0 0
        %345 = vmatpush1.bf16.msra.mxu0 0
        %346 = vmatprep.subr.bf16.mxu0 0
        %347 = vmatpush1.bf16.msra.mxu0 0
        %348 = vmatprep.subr.bf16.mxu0 0
        %349 = vmatpush1.bf16.msra.mxu0 0
        %350 = vmatprep.subr.bf16.mxu0 0
        %351 = vmatpush1.bf16.msra.mxu0 0
        %352 = vmatprep.subr.bf16.mxu0 0
        %353 = vmatpush1.bf16.msra.mxu0 0
        %354 = vmatprep.subr.bf16.mxu0 0
        %355 = vmatpush1.bf16.msra.mxu0 0
        %356 = vmatprep.subr.bf16.mxu0 0
        %357 = vmatpush1.bf16.msra.mxu0 0
        %358 = vmatprep.mubr.bf16.mxu0 0
        %359 = vmatmul.mubr.bf16.gmra.mrb[0].mxu0 %v324
        %v360 = vpop.f32.mrb[0].mxu0
        %v361 = vadd.f32 %v308, %v360
        %v362 = vpop.f32.mrb[0].mxu0
        %v363 = vpop.f32.mrb[0].mxu0
        %v364 = vadd.f32 %v308, %v363
        %v365 = vpop.f32.mrb[0].mxu0
        %366 = vdwg.mxu0
        %v367 = vmax.f32 %v361, 0.0
        %v368 = vmax.f32 %v364, 0.0
        %v369 = vpack.c.bf16 %v368, %v367
        %v370 = vld [vmem:[#allocation2] sm:$0xf]
        %v371 = vld [vmem:[#allocation2 + $0x4] sm:$0xf]
        %v372 = vld [vmem:[#allocation2 + $0x8] sm:$0xf]
        %v373 = vld [vmem:[#allocation2 + $0xc] sm:$0xf]
        %v374 = vld [vmem:[#allocation2 + $0x10] sm:$0xf]
        %v375 = vld [vmem:[#allocation2 + $0x14] sm:$0xf]
        %v376 = vld [vmem:[#allocation2 + $0x18] sm:$0xf]
        %v377 = vld [vmem:[#allocation2 + $0x1c] sm:$0xf]
        %v378 = vld [vmem:[%s4] sm:$0x1]
        %v380 = vlaneseq
        %v381 = vshrl.u32 %v380, 7
        %v382 = vsub.s32 0, %v381
        %v383 = vrot.slane %v378, %v382
        %v393 = vunpack.c.l.b16 %v370
        %v394 = vunpack.c.l.b16 %v371
        %v395 = vunpack.c.l.b16 %v372
        %v396 = vunpack.c.l.b16 %v373
        %v397 = vunpack.c.l.b16 %v374
        %v398 = vunpack.c.l.b16 %v375
        %v399 = vunpack.c.l.b16 %v376
        %v400 = vunpack.c.l.b16 %v377
        %v401 = vpack.c.b16 %v394, %v393
        %v402 = vpack.c.b16 %v396, %v395
        %v403 = vpack.c.b16 %v398, %v397
        %v404 = vpack.c.b16 %v400, %v399
        %vm409 = vcmask 523264
        %v411 = vsel %vm409, %v369, 0
        %413 = vmatprep.subr.bf16.mxu0 0
        %414 = vmatpush1.bf16.msra.mxu0 %v401
        %415 = vmatprep.subr.bf16.mxu0 0
        %416 = vmatpush1.bf16.msra.mxu0 %v402
        %417 = vmatprep.subr.bf16.mxu0 0
        %418 = vmatpush1.bf16.msra.mxu0 %v403
        %419 = vmatprep.subr.bf16.mxu0 0
        %420 = vmatpush1.bf16.msra.mxu0 %v404
        %421 = vmatprep.subr.bf16.mxu0 0
        %422 = vmatpush1.bf16.msra.mxu0 0
        %423 = vmatprep.subr.bf16.mxu0 0
        %424 = vmatpush1.bf16.msra.mxu0 0
        %425 = vmatprep.subr.bf16.mxu0 0
        %426 = vmatpush1.bf16.msra.mxu0 0
        %427 = vmatprep.subr.bf16.mxu0 0
        %428 = vmatpush1.bf16.msra.mxu0 0
        %429 = vmatprep.subr.bf16.mxu0 0
        %430 = vmatpush1.bf16.msra.mxu0 0
        %431 = vmatprep.subr.bf16.mxu0 0
        %432 = vmatpush1.bf16.msra.mxu0 0
        %433 = vmatprep.subr.bf16.mxu0 0
        %434 = vmatpush1.bf16.msra.mxu0 0
        %435 = vmatprep.subr.bf16.mxu0 0
        %436 = vmatpush1.bf16.msra.mxu0 0
        %437 = vmatprep.subr.bf16.mxu0 0
        %438 = vmatpush1.bf16.msra.mxu0 0
        %439 = vmatprep.subr.bf16.mxu0 0
        %440 = vmatpush1.bf16.msra.mxu0 0
        %441 = vmatprep.subr.bf16.mxu0 0
        %442 = vmatpush1.bf16.msra.mxu0 0
        %443 = vmatprep.subr.bf16.mxu0 0
        %444 = vmatpush1.bf16.msra.mxu0 0
        %445 = vmatprep.mubr.bf16.mxu0 0
        %446 = vmatmul.mubr.bf16.gmra.mrb[0].mxu0 %v411
        %v447 = vpop.f32.mrb[0].mxu0
        %v448 = vadd.f32 %v383, %v447
        %v449 = vpop.f32.mrb[0].mxu0
        %v450 = vpop.f32.mrb[0].mxu0
        %v451 = vadd.f32 %v383, %v450
        %v452 = vpop.f32.mrb[0].mxu0
        %453 = vdwg.mxu0
        %v454 = vmax.f32 %v448, 0.0
        %v455 = vmax.f32 %v451, 0.0
        %v456 = vpack.c.bf16 %v455, %v454
        %v457 = vld [vmem:[%s5] sm:$0xf]
        %v458 = vld [vmem:[%s5 + $0x4] sm:$0xf]
        %v459 = vld [vmem:[%s5 + $0x8] sm:$0xf]
        %v460 = vld [vmem:[%s5 + $0xc] sm:$0xf]
        %v461 = vld [vmem:[%s5 + $0x10] sm:$0xf]
        %v462 = vld [vmem:[%s5 + $0x14] sm:$0xf]
        %v463 = vld [vmem:[%s5 + $0x18] sm:$0xf]
        %v464 = vld [vmem:[%s5 + $0x1c] sm:$0xf]
        %v465 = vld [vmem:[%s6] sm:$0x1]
        %v467 = vlaneseq
        %v468 = vshrl.u32 %v467, 7
        %v469 = vsub.s32 0, %v468
        %v470 = vrot.slane %v465, %v469
        %v480 = vunpack.c.l.b16 %v457
        %v481 = vunpack.c.l.b16 %v458
        %v482 = vunpack.c.l.b16 %v459
        %v483 = vunpack.c.l.b16 %v460
        %v484 = vunpack.c.l.b16 %v461
        %v485 = vunpack.c.l.b16 %v462
        %v486 = vunpack.c.l.b16 %v463
        %v487 = vunpack.c.l.b16 %v464
        %v488 = vpack.c.b16 %v481, %v480
        %v489 = vpack.c.b16 %v483, %v482
        %v490 = vpack.c.b16 %v485, %v484
        %v491 = vpack.c.b16 %v487, %v486
        %v497 = vsel %vm409, %v456, 0
        %499 = vmatprep.subr.bf16.mxu0 0
        %500 = vmatpush1.bf16.msra.mxu0 %v488
        %501 = vmatprep.subr.bf16.mxu0 0
        %502 = vmatpush1.bf16.msra.mxu0 %v489
        %503 = vmatprep.subr.bf16.mxu0 0
        %504 = vmatpush1.bf16.msra.mxu0 %v490
        %505 = vmatprep.subr.bf16.mxu0 0
        %506 = vmatpush1.bf16.msra.mxu0 %v491
        %507 = vmatprep.subr.bf16.mxu0 0
        %508 = vmatpush1.bf16.msra.mxu0 0
        %509 = vmatprep.subr.bf16.mxu0 0
        %510 = vmatpush1.bf16.msra.mxu0 0
        %511 = vmatprep.subr.bf16.mxu0 0
        %512 = vmatpush1.bf16.msra.mxu0 0
        %513 = vmatprep.subr.bf16.mxu0 0
        %514 = vmatpush1.bf16.msra.mxu0 0
        %515 = vmatprep.subr.bf16.mxu0 0
        %516 = vmatpush1.bf16.msra.mxu0 0
        %517 = vmatprep.subr.bf16.mxu0 0
        %518 = vmatpush1.bf16.msra.mxu0 0
        %519 = vmatprep.subr.bf16.mxu0 0
        %520 = vmatpush1.bf16.msra.mxu0 0
        %521 = vmatprep.subr.bf16.mxu0 0
        %522 = vmatpush1.bf16.msra.mxu0 0
        %523 = vmatprep.subr.bf16.mxu0 0
        %524 = vmatpush1.bf16.msra.mxu0 0
        %525 = vmatprep.subr.bf16.mxu0 0
        %526 = vmatpush1.bf16.msra.mxu0 0
        %527 = vmatprep.subr.bf16.mxu0 0
        %528 = vmatpush1.bf16.msra.mxu0 0
        %529 = vmatprep.subr.bf16.mxu0 0
        %530 = vmatpush1.bf16.msra.mxu0 0
        %531 = vmatprep.mubr.bf16.mxu0 0
        %532 = vmatmul.mubr.bf16.gmra.mrb[0].mxu0 %v497
        %v533 = vpop.f32.mrb[0].mxu0
        %v534 = vadd.f32 %v470, %v533
        %v535 = vpop.f32.mrb[0].mxu0
        %v536 = vpop.f32.mrb[0].mxu0
        %v537 = vadd.f32 %v470, %v536
        %v538 = vpop.f32.mrb[0].mxu0
        %539 = vdwg.mxu0
        %540 = vst.msk [vmem:[%s287] sm:$0xff] %vm322, %v534
        %541 = vst.msk [vmem:[%s287 + $0x8] sm:$0xff] %vm322, %v537
        %s542 = sand.u32 %s182, 1
        %s543 = scalar_lea.sflag [#allocation4], %s542
        %s544 = sand.u32 %s182, 1
        %s545 = smul.addr %s544, 16
        %s546 = scalar_lea.vmem [#allocation5], %s545
        // Predicated region
        $region53: #{tpu_custom_call.1} parent=47 // pred_check
          %p547 = pneg %p192
        $region54: #{tpu_custom_call.1} parent=47 // pred_check_branch
          %549 = sbr.rel (%p547) target = $region56
        $region55: #{tpu_custom_call.1} parent=47 // pred_region
          %s550 = smul.u32 2, %s22
          %s552 = ssub.s32 256, 256
          %553 = vsyncadd %s543, %s552
          %s554 = smul.addr %s550, 128
          %s555 = scalar_lea.hbm %s7, %s554
          %s556 = sshll.u32 %s546, 4
          %s557 = int_to_ptr.vmem [resolvable:$true] %s556
          %562 = dma.vmem_to_hbm [thread:$0]  %s557, 256, %s555, %s543, 128, 128, 8
        $region56: #{tpu_custom_call.1} parent=47 // pred_fallthru
          _
      $region48: #{tpu_custom_call.1} parent=5 // pred_fallthru
        _
      %p563 = scmp.le.s32.totalorder 2, %s17
      // Predicated region
      $region57: #{tpu_custom_call.1} parent=5 // pred_check
        %p564 = pneg %p563
      $region58: #{tpu_custom_call.1} parent=5 // pred_check_branch
        %566 = sbr.rel (%p564) target = $region60
      $region59: #{tpu_custom_call.1} parent=5 // pred_region
        %s567 = ssub.s32 %s17, 2
        // Predicated region
        $region61: #{tpu_custom_call.1} parent=59 // pred_check
          %p568 = pneg %p198
        $region62: #{tpu_custom_call.1} parent=59 // pred_check_branch
          %570 = sbr.rel (%p568) target = $region64
        $region63: #{tpu_custom_call.1} parent=59 // pred_region
          %s571 = sand.u32 %s183, 1
          %s572 = scalar_lea.sflag [#allocation4], %s571
          %s573 = sand.u32 %s183, 1
          %s574 = smul.addr %s573, 16
          %s575 = scalar_lea.vmem [#allocation5], %s574
          %576 = dma.done %s572, 256
        $region64: #{tpu_custom_call.1} parent=59 // pred_fallthru
          _
      $region60: #{tpu_custom_call.1} parent=5 // pred_fallthru
        _
    $region6: #{tpu_custom_call.1} parent=1 // loop_footer
      %s21 = sadd.s32 1, %s17
    $region7: #{tpu_custom_call.1} parent=1 // loop_footer_branch
      %16 = sbr.rel target = $region3
    $region8: #{tpu_custom_call.1} parent=1 // loop_exit
      _
    %577 = vsyncpa [#allocation3], 1
    %s578 = scalar_lea.sflag [#allocation3], 1
    %579 = vsyncpa %s578, 1
    %580 = vsyncpa [#allocation4], 1
    %s581 = scalar_lea.sflag [#allocation4], 1
    %582 = vsyncpa %s581, 1

</llo_original>
